<compile_context>
chip_gen: v7x
topology: tpu7x:2x2x1
jax: 0.10.0
libtpu: 0.0.40
codegen_flags: <defaults>
</compile_context>

<pallas_src>
import functools

import numpy as np
import jax
import jax.numpy as jnp
from jax.experimental import pallas as pl
from jax.experimental.pallas import tpu as pltpu


def _round_up(x, m):
    return (x + m - 1) // m * m


def _embeddings_mlp_kernel(n_hidden, *refs):
    """Fused MLP: (u, m) -> split first Linear -> [ReLU -> Linear]* -> lane-dense out."""
    u_ref, m_ref = refs[0], refs[1]
    w1u_ref, w1m_ref, b1_ref = refs[2], refs[3], refs[4]
    pos = 5
    rest = []
    for _ in range(max(n_hidden - 1, 0)):
        rest.append((refs[pos], refs[pos + 1]))
        pos += 2
    if n_hidden > 0:
        w_out_ref, b_out_ref = refs[pos], refs[pos + 1]
        pos += 2
    out_ref = refs[pos]

    # First Linear without the lane-axis concat:
    #   concat([u, m], 1) @ W1  ==  u @ W1[:E]  +  m @ W1[E:]
    x = (
        jnp.dot(u_ref[...], w1u_ref[...], preferred_element_type=jnp.float32)
        + jnp.dot(m_ref[...], w1m_ref[...], preferred_element_type=jnp.float32)
        + b1_ref[...].astype(jnp.float32)
    )

    if n_hidden == 0:
        # Degenerate case (no hidden layers): the split linear above IS the output.
        out_ref[...] = jnp.reshape(x, (1, -1))
        return

    x = jnp.maximum(x, 0.0)  # F.relu (kept in f32)
    # TODO(synk): nn.Dropout is identity in eval mode; training-mode dropout would
    # use pltpu.prng_seed + pltpu.prng_random_bits here.

    for w_ref, b_ref in rest:
        x = (
            jnp.dot(x.astype(w_ref.dtype), w_ref[...],
                    preferred_element_type=jnp.float32)
            + b_ref[...].astype(jnp.float32)
        )
        x = jnp.maximum(x, 0.0)

    # Output Linear(H, 1) as VPU multiply + XLU lane-reduce -> lane-dense (1, TILE_B)
    # store (avoids a 1-lane-wide matmul result and masked column stores).
    w_row = w_out_ref[...].astype(jnp.float32)                     # (1, H)
    y = jnp.sum(x * w_row, axis=-1) + b_out_ref[0, 0]              # (TILE_B,)
    out_ref[...] = y[None, :]


def embeddings_net_forward(user_ids, movie_ids, params, *, tile_b=512):
    """JAX wrapper reproducing EmbeddingsNet.forward (eval mode)."""
    # Embedding gather (plain JAX glue).  jnp.take clamps OOB ids (PyTorch raises).
    u = jnp.take(params["user_embed"], user_ids, axis=0)    # (B, E) bf16
    m = jnp.take(params["movie_embed"], movie_ids, axis=0)  # (B, E) bf16

    hidden = params["hidden"]                 # list of (W:(in,out) bf16, b:(1,out) f32)
    w_out, b_out = params["output"]           # (H, 1) bf16, (1, 1) f32
    n_hidden = len(hidden)

    batch, emb = u.shape
    tile_b = min(tile_b, _round_up(batch, 8))
    padded = _round_up(batch, tile_b)
    if padded != batch:
        u = jnp.pad(u, ((0, padded - batch), (0, 0)))
        m = jnp.pad(m, ((0, padded - batch), (0, 0)))
    grid = (padded // tile_b,)

    operands = [u, m]
    if n_hidden > 0:
        w1, b1 = hidden[0]
        operands += [w1[:emb], w1[emb:], b1]          # split first-layer weight
        for w, b in hidden[1:]:
            operands += [w, b]
        operands += [jnp.transpose(w_out), b_out]     # (1, H) row for lane reduce
    else:
        operands += [w_out[:emb], w_out[emb:], b_out]

    in_specs = [
        pl.BlockSpec((tile_b, emb), lambda i: (i, 0)),
        pl.BlockSpec((tile_b, emb), lambda i: (i, 0)),
    ]
    # Weights / biases: full-array blocks, same block index every step -> resident.
    for op in operands[2:]:
        in_specs.append(pl.BlockSpec(op.shape, lambda i: (0, 0)))

    out_specs = pl.BlockSpec((1, tile_b), lambda i: (0, i))

    # Rough VMEM budget: double-buffered activation tiles + resident weights + slack.
    act_bytes = 2 * 2 * tile_b * emb * u.dtype.itemsize + 2 * tile_b * 4
    w_bytes = sum(int(np.prod(op.shape)) * op.dtype.itemsize for op in operands[2:])
    vmem_limit = int(min(max(4 * (act_bytes + w_bytes) + (2 << 20), 16 << 20), 48 << 20))

    flops = 2 * padded * sum(int(np.prod(w.shape)) for w, _ in hidden)
    flops += 2 * padded * int(np.prod(w_out.shape))
    bytes_accessed = 2 * padded * emb * u.dtype.itemsize + w_bytes + padded * 4

    kernel = functools.partial(_embeddings_mlp_kernel, n_hidden)
    out = pl.pallas_call(
        kernel,
        out_shape=jax.ShapeDtypeStruct((1, padded), jnp.float32),
        grid_spec=pltpu.PrefetchScalarGridSpec(
            num_scalar_prefetch=0,
            grid=grid,
            in_specs=in_specs,
            out_specs=out_specs,
        ),
        compiler_params=pltpu.CompilerParams(
            dimension_semantics=("parallel",),   # v7x: shard batch tiles over 2 TCs
            vmem_limit_bytes=vmem_limit,
        ),
        cost_estimate=pl.CostEstimate(
            flops=flops, transcendentals=0, bytes_accessed=bytes_accessed
        ),
    )(*operands)

    return out[0, :batch, None]   # back to (B, 1), drop batch padding


def init_params(key, n_users, n_movies, layers):
    """Deterministic init matching the PyTorch module's parameter shapes.

    Embedding tables and Linear weights are stored in bf16 (MXU-native, halves
    HBM traffic on the gather path); biases stay f32.
    """
    k_user, k_movie, k = jax.random.split(key, 3)
    params = {
        # nn.Embedding default init: N(0, 1)
        "user_embed": jax.random.normal(
            k_user, (n_users, layers[0]), jnp.float32).astype(jnp.bfloat16),
        "movie_embed": jax.random.normal(
            k_movie, (n_movies, layers[0]), jnp.float32).astype(jnp.bfloat16),
    }
    hidden = []
    for n_in, n_out in zip(layers[:-1], layers[1:]):
        k, kw, kb = jax.random.split(k, 3)
        fan_in = n_in * 2
        bound = 1.0 / np.sqrt(fan_in)
        w = jax.random.uniform(kw, (fan_in, n_out * 2), jnp.float32, -bound, bound)
        b = jax.random.uniform(kb, (1, n_out * 2), jnp.float32, -bound, bound)
        hidden.append((w.astype(jnp.bfloat16), b))
    params["hidden"] = hidden

    k, kw, kb = jax.random.split(k, 3)
    fan_in = layers[-1] * 2
    bound = 1.0 / np.sqrt(fan_in)
    params["output"] = (
        jax.random.uniform(kw, (fan_in, 1), jnp.float32, -bound, bound).astype(jnp.bfloat16),
        jax.random.uniform(kb, (1, 1), jnp.float32, -bound, bound),
    )
    return params


def _reference_forward(user_ids, movie_ids, params):
    """Pure-JAX reference mirroring the kernel's precision recipe (eval mode)."""
    u = jnp.take(params["user_embed"], user_ids, axis=0)
    m = jnp.take(params["movie_embed"], movie_ids, axis=0)
    x = jnp.concatenate([u, m], axis=1)                     # bf16
    for idx, (w, b) in enumerate(params["hidden"]):
        if idx > 0:
            x = x.astype(w.dtype)
        x = jnp.dot(x, w, preferred_element_type=jnp.float32) + b.astype(jnp.float32)
        x = jnp.maximum(x, 0.0)
    w_out, b_out = params["output"]
    y = jnp.sum(x * w_out[:, 0].astype(jnp.float32)[None, :], axis=-1, keepdims=True)
    return y + b_out


if __name__ == "__main__":
    n_users, n_movies = 50, 40
    layers = [32, 16]          # -> hidden Linear(64, 32), output Linear(32, 1)
    batch = 8

    key = jax.random.PRNGKey(0)
    k_params, k_u, k_m = jax.random.split(key, 3)
    params = init_params(k_params, n_users, n_movies, layers)

    users = jax.random.randint(k_u, (batch,), 0, n_users, dtype=jnp.int32)
    movies = jax.random.randint(k_m, (batch,), 0, n_movies, dtype=jnp.int32)

    out = jax.block_until_ready(embeddings_net_forward(users, movies, params))
    ref = jax.block_until_ready(_reference_forward(users, movies, params))

    assert out.shape == (batch, 1), out.shape
    np.testing.assert_allclose(np.asarray(out), np.asarray(ref), rtol=1e-3, atol=1e-3)

    print("KERNEL_OK")
</pallas_src>

<mosaic_0001>
module attributes {stable_mosaic.version = 11 : i64} {
  func.func @_embeddings_mlp_kernel(%arg0: i32, %arg1: memref<8x32xbf16, #tpu.memory_space<vmem>>, %arg2: memref<8x32xbf16, #tpu.memory_space<vmem>>, %arg3: memref<32x32xbf16, #tpu.memory_space<vmem>>, %arg4: memref<32x32xbf16, #tpu.memory_space<vmem>>, %arg5: memref<1x32xf32, #tpu.memory_space<vmem>>, %arg6: memref<1x32xbf16, #tpu.memory_space<vmem>>, %arg7: memref<1x1xf32, #tpu.memory_space<vmem>>, %arg8: memref<1x8xf32, #tpu.memory_space<vmem>>) attributes {dimension_semantics = [#tpu.dimension_semantics<parallel>], iteration_bounds = array<i64: 1>, scalar_prefetch = 0 : i64, scratch_operands = 0 : i64, tpu.core_type = #tpu.core_type<tc>, window_params = [{transform_indices = @transform_0, window_bounds = array<i64: 8, 32>}, {transform_indices = @transform_1, window_bounds = array<i64: 8, 32>}, {pipeline_mode = #tpu.pipeline_mode<synchronous>, transform_indices = @transform_2, window_bounds = array<i64: 32, 32>}, {pipeline_mode = #tpu.pipeline_mode<synchronous>, transform_indices = @transform_3, window_bounds = array<i64: 32, 32>}, {pipeline_mode = #tpu.pipeline_mode<synchronous>, transform_indices = @transform_4, window_bounds = array<i64: 1, 32>}, {pipeline_mode = #tpu.pipeline_mode<synchronous>, transform_indices = @transform_5, window_bounds = array<i64: 1, 32>}, {pipeline_mode = #tpu.pipeline_mode<synchronous>, transform_indices = @transform_6, window_bounds = array<i64: 1, 1>}, {transform_indices = @transform_7, window_bounds = array<i64: 1, 8>}]} {
    %c0 = arith.constant 0 : index
    %c0_0 = arith.constant 0 : index
    %0 = vector.load %arg1[%c0, %c0_0] : memref<8x32xbf16, #tpu.memory_space<vmem>>, vector<8x32xbf16>
    %c0_1 = arith.constant 0 : index
    %c0_2 = arith.constant 0 : index
    %1 = vector.load %arg3[%c0_1, %c0_2] : memref<32x32xbf16, #tpu.memory_space<vmem>>, vector<32x32xbf16>
    %cst = arith.constant dense<0.000000e+00> : vector<8x32xf32>
    %2 = tpu.matmul %0, %1, %cst {dimension_numbers = #tpu.dot_dimension_numbers<[1], [0], [0], [1], [0, 0, 1, 1], [], []>} : vector<8x32xbf16>, vector<32x32xbf16>, vector<8x32xf32> -> vector<8x32xf32>
    %c0_3 = arith.constant 0 : index
    %c0_4 = arith.constant 0 : index
    %3 = vector.load %arg2[%c0_3, %c0_4] : memref<8x32xbf16, #tpu.memory_space<vmem>>, vector<8x32xbf16>
    %c0_5 = arith.constant 0 : index
    %c0_6 = arith.constant 0 : index
    %4 = vector.load %arg4[%c0_5, %c0_6] : memref<32x32xbf16, #tpu.memory_space<vmem>>, vector<32x32xbf16>
    %cst_7 = arith.constant dense<0.000000e+00> : vector<8x32xf32>
    %5 = tpu.matmul %3, %4, %cst_7 {dimension_numbers = #tpu.dot_dimension_numbers<[1], [0], [0], [1], [0, 0, 1, 1], [], []>} : vector<8x32xbf16>, vector<32x32xbf16>, vector<8x32xf32> -> vector<8x32xf32>
    %6 = arith.addf %2, %5 : vector<8x32xf32>
    %c0_8 = arith.constant 0 : index
    %c0_9 = arith.constant 0 : index
    %7 = vector.load %arg5[%c0_8, %c0_9] : memref<1x32xf32, #tpu.memory_space<vmem>>, vector<1x32xf32>
    %8 = vector.broadcast %7 : vector<1x32xf32> to vector<8x32xf32>
    %9 = arith.addf %6, %8 : vector<8x32xf32>
    %cst_10 = arith.constant 0.000000e+00 : f32
    %10 = vector.broadcast %cst_10 : f32 to vector<8x32xf32>
    %11 = arith.maximumf %9, %10 : vector<8x32xf32>
    %c0_11 = arith.constant 0 : index
    %c0_12 = arith.constant 0 : index
    %12 = vector.load %arg6[%c0_11, %c0_12] : memref<1x32xbf16, #tpu.memory_space<vmem>>, vector<1x32xbf16>
    %13 = arith.extf %12 : vector<1x32xbf16> to vector<1x32xf32>
    %14 = vector.broadcast %13 : vector<1x32xf32> to vector<8x32xf32>
    %15 = arith.mulf %11, %14 : vector<8x32xf32>
    %cst_13 = arith.constant dense<0.000000e+00> : vector<8xf32>
    %16 = vector.multi_reduction <add>, %15, %cst_13 [1] : vector<8x32xf32> to vector<8xf32>
    %c0_14 = arith.constant 0 : index
    %c0_15 = arith.constant 0 : index
    %17 = vector.load %arg7[%c0_14, %c0_15] : memref<1x1xf32, #tpu.memory_space<vmem>>, vector<1x1xf32>
    %18 = vector.extract %17[0, 0] : f32 from vector<1x1xf32>
    %19 = vector.broadcast %18 : f32 to vector<8xf32>
    %20 = arith.addf %16, %19 : vector<8xf32>
    %21 = vector.shape_cast %20 : vector<8xf32> to vector<1x8xf32>
    %c0_16 = arith.constant 0 : index
    %c0_17 = arith.constant 0 : index
    %22 = vector.load %arg8[%c0_16, %c0_17] : memref<1x8xf32, #tpu.memory_space<vmem>>, vector<1x8xf32>
    tpu.vector_store %arg8[%c0_16, %c0_17], %21 {strides = array<i32>} : memref<1x8xf32, #tpu.memory_space<vmem>>, vector<1x8xf32>,
    return
  }
  func.func @transform_0(%arg0: i32) -> (i32, i32) {
    %c0_i32 = arith.constant 0 : i32
    %c0_i32_0 = arith.constant 0 : i32
    return %arg0, %c0_i32 : i32, i32
  }
  func.func @transform_1(%arg0: i32) -> (i32, i32) {
    %c0_i32 = arith.constant 0 : i32
    %c0_i32_0 = arith.constant 0 : i32
    return %arg0, %c0_i32 : i32, i32
  }
  func.func @transform_2(%arg0: i32) -> (i32, i32) {
    %c0_i32 = arith.constant 0 : i32
    %c0_i32_0 = arith.constant 0 : i32
    %c0_i32_1 = arith.constant 0 : i32
    return %c0_i32, %c0_i32_0 : i32, i32
  }
  func.func @transform_3(%arg0: i32) -> (i32, i32) {
    %c0_i32 = arith.constant 0 : i32
    %c0_i32_0 = arith.constant 0 : i32
    %c0_i32_1 = arith.constant 0 : i32
    return %c0_i32, %c0_i32_0 : i32, i32
  }
  func.func @transform_4(%arg0: i32) -> (i32, i32) {
    %c0_i32 = arith.constant 0 : i32
    %c0_i32_0 = arith.constant 0 : i32
    %c0_i32_1 = arith.constant 0 : i32
    return %c0_i32, %c0_i32_0 : i32, i32
  }
  func.func @transform_5(%arg0: i32) -> (i32, i32) {
    %c0_i32 = arith.constant 0 : i32
    %c0_i32_0 = arith.constant 0 : i32
    %c0_i32_1 = arith.constant 0 : i32
    return %c0_i32, %c0_i32_0 : i32, i32
  }
  func.func @transform_6(%arg0: i32) -> (i32, i32) {
    %c0_i32 = arith.constant 0 : i32
    %c0_i32_0 = arith.constant 0 : i32
    %c0_i32_1 = arith.constant 0 : i32
    return %c0_i32, %c0_i32_0 : i32, i32
  }
  func.func @transform_7(%arg0: i32) -> (i32, i32) {
    %c0_i32 = arith.constant 0 : i32
    %c0_i32_0 = arith.constant 0 : i32
    return %c0_i32, %arg0 : i32, i32
  }
}

</mosaic_0001>

<llo_original>
// kernel: tpu_custom_call.1
$region0: #{tpu_custom_call.1}
  #allocation0 [shape = 'u32[]', space=smem, size = 0x4, offset = 0x4, fixed_abs, tag = 'smem constant byte address 0x4 - core index']
  #allocation1 [shape = 'u32[144,128]{1,0:T(1,128)}', space=vmem, size = 0x12000, scoped, tag = 'internal scratch']
  #allocation2 [shape = 'f32[1,1]{1,0:T(1,128)S(1)}', space=vmem, size = 0x200, scoped, tag = 'scoped memory for tpu_custom_call.1']
  %s0 = inlined_call_operand.hbm [shape: bf16[8,32], index: 0, kind: input, shape index: {}]
  %s1 = inlined_call_operand.vmem [shape: bf16[8,32], index: 1, kind: input, shape index: {}]
  %s2 = inlined_call_operand.hbm [shape: bf16[32,32], index: 2, kind: input, shape index: {}]
  %s3 = inlined_call_operand.hbm [shape: bf16[32,32], index: 3, kind: input, shape index: {}]
  %s4 = inlined_call_operand.vmem [shape: f32[1,32], index: 4, kind: input, shape index: {}]
  %s5 = inlined_call_operand.vmem [shape: bf16[1,32], index: 5, kind: input, shape index: {}]
  %s6 = inlined_call_operand.<no memory space> [shape: f32[1,1], index: 6, kind: input, shape index: {}]
  %s7 = inlined_call_operand.hbm [shape: f32[1,8], index: 7, kind: output, shape index: {}]
  %s8 = sld [smem:[#allocation0]]
  $region50: #{tpu_custom_call.1} parent=0
    _
  %s10 = ssub.s32 1, %s8
  %s11 = scalar_select 0, %s10, %s8
  %v12 = vstv %s6
  %13 = vst [vmem:[#allocation2] sm:$0x1] %v12
  $region1: #{tpu_custom_call.1} parent=0
    #allocation3 [shape = 'u8[2048]{0}', space=vmem, size = 0x800, scoped, tag = 'input window, operand 0, single buffered']
    #allocation4 [shape = 's32[1]{0}', space=sflag, size = 0x4, scoped, tag = 'scoped memory for tpu_custom_call.1']
    #allocation5 [shape = 's32[1]{0}', space=sflag, size = 0x4, scoped, tag = 'scoped memory for tpu_custom_call.1']
    #allocation6 [shape = 'u8[8192]{0}', space=vmem, size = 0x2000, scoped, tag = 'input window, operand 2, single buffered']
    #allocation7 [shape = 's32[1]{0}', space=sflag, size = 0x4, scoped, tag = 'scoped memory for tpu_custom_call.1']
    #allocation8 [shape = 'u8[8192]{0}', space=vmem, size = 0x2000, scoped, tag = 'input window, operand 3, single buffered']
    #allocation9 [shape = 'u8[512]{0}', space=vmem, size = 0x400, scoped, tag = 'output window, operand 0, single buffered']
    %14 = vsyncpa [#allocation4], 0
    %15 = vsyncpa [#allocation7], 0
    %16 = vsyncpa [#allocation5], 0
    // Predicated region
    $region2: #{tpu_custom_call.1} parent=1 // pred_check
      _
    $region3: #{tpu_custom_call.1} parent=1 // pred_check_branch
      %18 = sbr.rel (0) target = $region5
    $region4: #{tpu_custom_call.1} parent=1 // pred_region
      %s20 = ssub.s32 64, 64
      %21 = vsyncadd [#allocation4], %s20
      %s23 = sshll.u32 [#allocation3], 4
      %s24 = int_to_ptr.vmem [resolvable:$true] %s23
      %26 = dma.hbm_to_vmem [thread:$0]  %s0, 64, %s24, [#allocation4]
    $region5: #{tpu_custom_call.1} parent=1 // pred_fallthru
      _
    // Predicated region
    $region6: #{tpu_custom_call.1} parent=1 // pred_check
      _
    $region7: #{tpu_custom_call.1} parent=1 // pred_check_branch
      %28 = sbr.rel (0) target = $region9
    $region8: #{tpu_custom_call.1} parent=1 // pred_region
      _
    $region9: #{tpu_custom_call.1} parent=1 // pred_fallthru
      _
    // Predicated region
    $region10: #{tpu_custom_call.1} parent=1 // pred_check
      _
    $region11: #{tpu_custom_call.1} parent=1 // pred_check_branch
      %30 = sbr.rel (0) target = $region13
    $region12: #{tpu_custom_call.1} parent=1 // pred_region
      %s32 = ssub.s32 256, 256
      %33 = vsyncadd [#allocation7], %s32
      %s34 = sshll.u32 [#allocation6], 4
      %s35 = int_to_ptr.vmem [resolvable:$true] %s34
      %40 = dma.hbm_to_vmem [thread:$0]  %s2, 256, %s35, [#allocation7], 64, 64, 4
    $region13: #{tpu_custom_call.1} parent=1 // pred_fallthru
      _
    // Predicated region
    $region14: #{tpu_custom_call.1} parent=1 // pred_check
      _
    $region15: #{tpu_custom_call.1} parent=1 // pred_check_branch
      %42 = sbr.rel (0) target = $region17
    $region16: #{tpu_custom_call.1} parent=1 // pred_region
      %s44 = ssub.s32 256, 256
      %45 = vsyncadd [#allocation7], %s44
      %s46 = sshll.u32 [#allocation8], 4
      %s47 = int_to_ptr.vmem [resolvable:$true] %s46
      %52 = dma.hbm_to_vmem [thread:$0]  %s3, 256, %s47, [#allocation7], 64, 64, 4
    $region17: #{tpu_custom_call.1} parent=1 // pred_fallthru
      _
    // Predicated region
    $region18: #{tpu_custom_call.1} parent=1 // pred_check
      _
    $region19: #{tpu_custom_call.1} parent=1 // pred_check_branch
      %54 = sbr.rel (0) target = $region21
    $region20: #{tpu_custom_call.1} parent=1 // pred_region
      _
    $region21: #{tpu_custom_call.1} parent=1 // pred_fallthru
      _
    // Predicated region
    $region22: #{tpu_custom_call.1} parent=1 // pred_check
      _
    $region23: #{tpu_custom_call.1} parent=1 // pred_check_branch
      %56 = sbr.rel (0) target = $region25
    $region24: #{tpu_custom_call.1} parent=1 // pred_region
      _
    $region25: #{tpu_custom_call.1} parent=1 // pred_fallthru
      _
    // Predicated region
    $region26: #{tpu_custom_call.1} parent=1 // pred_check
      _
    $region27: #{tpu_custom_call.1} parent=1 // pred_check_branch
      %58 = sbr.rel (0) target = $region29
    $region28: #{tpu_custom_call.1} parent=1 // pred_region
      _
    $region29: #{tpu_custom_call.1} parent=1 // pred_fallthru
      _
    // Predicated region
    $region30: #{tpu_custom_call.1} parent=1 // pred_check
      _
    $region31: #{tpu_custom_call.1} parent=1 // pred_check_branch
      %60 = sbr.rel (0) target = $region33
    $region32: #{tpu_custom_call.1} parent=1 // pred_region
      %61 = dma.done [#allocation4], 64
    $region33: #{tpu_custom_call.1} parent=1 // pred_fallthru
      _
    // Predicated region
    $region34: #{tpu_custom_call.1} parent=1 // pred_check
      _
    $region35: #{tpu_custom_call.1} parent=1 // pred_check_branch
      %63 = sbr.rel (0) target = $region37
    $region36: #{tpu_custom_call.1} parent=1 // pred_region
      %64 = dma.done [#allocation7], 256
    $region37: #{tpu_custom_call.1} parent=1 // pred_fallthru
      _
    // Predicated region
    $region38: #{tpu_custom_call.1} parent=1 // pred_check
      _
    $region39: #{tpu_custom_call.1} parent=1 // pred_check_branch
      %66 = sbr.rel (0) target = $region41
    $region40: #{tpu_custom_call.1} parent=1 // pred_region
      %67 = dma.done [#allocation7], 256
    $region41: #{tpu_custom_call.1} parent=1 // pred_fallthru
      _
    %v69 = vld [vmem:[#allocation3] sm:$0xf]
    %v70 = vld [vmem:[#allocation6] sm:$0xf]
    %v71 = vld [vmem:[#allocation6 + $0x4] sm:$0xf]
    %v72 = vld [vmem:[#allocation6 + $0x8] sm:$0xf]
    %v73 = vld [vmem:[#allocation6 + $0xc] sm:$0xf]
    %v74 = vld [vmem:[%s1] sm:$0xf]
    %v75 = vld [vmem:[#allocation8] sm:$0xf]
    %v76 = vld [vmem:[#allocation8 + $0x4] sm:$0xf]
    %v77 = vld [vmem:[#allocation8 + $0x8] sm:$0xf]
    %v78 = vld [vmem:[#allocation8 + $0xc] sm:$0xf]
    %v83 = vunpack.c.l.b16 %v75
    %v84 = vunpack.c.l.b16 %v76
    %v85 = vunpack.c.l.b16 %v77
    %v86 = vunpack.c.l.b16 %v78
    %v87 = vpack.c.b16 %v84, %v83
    %v88 = vpack.c.b16 %v86, %v85
    %vm91 = vcmask 261120
    %v93 = vsel %vm91, %v74, 0
    %95 = vmatprep.subr.bf16.mxu0 0
    %96 = vmatpush1.bf16.msra.mxu0 %v87
    %97 = vmatprep.subr.bf16.mxu0 0
    %98 = vmatpush1.bf16.msra.mxu0 %v88
    %99 = vmatprep.subr.bf16.mxu0 0
    %100 = vmatpush1.bf16.msra.mxu0 0
    %101 = vmatprep.subr.bf16.mxu0 0
    %102 = vmatpush1.bf16.msra.mxu0 0
    %103 = vmatprep.subr.bf16.mxu0 0
    %104 = vmatpush1.bf16.msra.mxu0 0
    %105 = vmatprep.subr.bf16.mxu0 0
    %106 = vmatpush1.bf16.msra.mxu0 0
    %107 = vmatprep.subr.bf16.mxu0 0
    %108 = vmatpush1.bf16.msra.mxu0 0
    %109 = vmatprep.subr.bf16.mxu0 0
    %110 = vmatpush1.bf16.msra.mxu0 0
    %111 = vmatprep.subr.bf16.mxu0 0
    %112 = vmatpush1.bf16.msra.mxu0 0
    %113 = vmatprep.subr.bf16.mxu0 0
    %114 = vmatpush1.bf16.msra.mxu0 0
    %115 = vmatprep.subr.bf16.mxu0 0
    %116 = vmatpush1.bf16.msra.mxu0 0
    %117 = vmatprep.subr.bf16.mxu0 0
    %118 = vmatpush1.bf16.msra.mxu0 0
    %119 = vmatprep.subr.bf16.mxu0 0
    %120 = vmatpush1.bf16.msra.mxu0 0
    %121 = vmatprep.subr.bf16.mxu0 0
    %122 = vmatpush1.bf16.msra.mxu0 0
    %123 = vmatprep.subr.bf16.mxu0 0
    %124 = vmatpush1.bf16.msra.mxu0 0
    %125 = vmatprep.subr.bf16.mxu0 0
    %126 = vmatpush1.bf16.msra.mxu0 0
    %127 = vmatprep.mubr.bf16.mxu0 0
    %128 = vmatmul.mubr.bf16.gmra.mrb[0].mxu0 %v93
    %v129 = vpop.f32.mrb[0].mxu0
    %v130 = vadd.f32 0.0, %v129
    %v131 = vpop.f32.mrb[0].mxu0
    %v132 = vpop.f32.mrb[0].mxu0
    %v133 = vpop.f32.mrb[0].mxu0
    %134 = vdwg.mxu0
    %v139 = vunpack.c.l.b16 %v70
    %v140 = vunpack.c.l.b16 %v71
    %v141 = vunpack.c.l.b16 %v72
    %v142 = vunpack.c.l.b16 %v73
    %v143 = vpack.c.b16 %v140, %v139
    %v144 = vpack.c.b16 %v142, %v141
    %v148 = vsel %vm91, %v69, 0
    %150 = vmatprep.subr.bf16.mxu0 0
    %151 = vmatpush1.bf16.msra.mxu0 %v143
    %152 = vmatprep.subr.bf16.mxu0 0
    %153 = vmatpush1.bf16.msra.mxu0 %v144
    %154 = vmatprep.subr.bf16.mxu0 0
    %155 = vmatpush1.bf16.msra.mxu0 0
    %156 = vmatprep.subr.bf16.mxu0 0
    %157 = vmatpush1.bf16.msra.mxu0 0
    %158 = vmatprep.subr.bf16.mxu0 0
    %159 = vmatpush1.bf16.msra.mxu0 0
    %160 = vmatprep.subr.bf16.mxu0 0
    %161 = vmatpush1.bf16.msra.mxu0 0
    %162 = vmatprep.subr.bf16.mxu0 0
    %163 = vmatpush1.bf16.msra.mxu0 0
    %164 = vmatprep.subr.bf16.mxu0 0
    %165 = vmatpush1.bf16.msra.mxu0 0
    %166 = vmatprep.subr.bf16.mxu0 0
    %167 = vmatpush1.bf16.msra.mxu0 0
    %168 = vmatprep.subr.bf16.mxu0 0
    %169 = vmatpush1.bf16.msra.mxu0 0
    %170 = vmatprep.subr.bf16.mxu0 0
    %171 = vmatpush1.bf16.msra.mxu0 0
    %172 = vmatprep.subr.bf16.mxu0 0
    %173 = vmatpush1.bf16.msra.mxu0 0
    %174 = vmatprep.subr.bf16.mxu0 0
    %175 = vmatpush1.bf16.msra.mxu0 0
    %176 = vmatprep.subr.bf16.mxu0 0
    %177 = vmatpush1.bf16.msra.mxu0 0
    %178 = vmatprep.subr.bf16.mxu0 0
    %179 = vmatpush1.bf16.msra.mxu0 0
    %180 = vmatprep.subr.bf16.mxu0 0
    %181 = vmatpush1.bf16.msra.mxu0 0
    %182 = vmatprep.mubr.bf16.mxu0 0
    %183 = vmatmul.mubr.bf16.gmra.mrb[0].mxu0 %v148
    %v184 = vpop.f32.mrb[0].mxu0
    %v185 = vadd.f32 %v130, %v184
    %v186 = vpop.f32.mrb[0].mxu0
    %v187 = vpop.f32.mrb[0].mxu0
    %v188 = vpop.f32.mrb[0].mxu0
    %189 = vdwg.mxu0
    %v190 = vld [vmem:[%s4] sm:$0x1]
    %v192 = vlaneseq
    %v193 = vshrl.u32 %v192, 7
    %v194 = vsub.s32 0, %v193
    %v195 = vrot.slane %v190, %v194
    %v197 = vadd.f32 %v185, %v195
    %v198 = vmax.f32 %v197, 0.0
    %v199 = vld [vmem:[%s5] sm:$0x1]
    %v200 = vunpack.c.l.bf16 %v199
    %v201 = vlaneseq
    %v202 = vshrl.u32 %v201, 7
    %v203 = vsub.s32 0, %v202
    %v204 = vrot.slane %v200, %v203
    %v205 = vmul.f32 %v198, %v204
    %v206 = vsel %vm91, %v205, 0.0
    %207 = vadd.xlane.f32.xlu0 %v206
    %v208 = vpop.xlane.xlu0 %207
    %v209 = vld [vmem:[#allocation2] sm:$0x1]
    %s210 = vtos %v209
    %v211 = vstv %s210
    %v212 = vadd.f32 %v208, %v211
    %v214 = vlaneseq
    %v215 = vand.u32 %v214, 127
    %v216 = vlaneseq
    %v217 = vshrl.u32 %v216, 7
    %v218 = vsub.s32 %v215, %v217
    %v219 = vrot.slane %v212, %v218
    %vm221 = vcmask 57344
    %222 = vst.msk [vmem:[#allocation9] sm:$0x1] %vm221, %v219
    // Predicated region
    $region42: #{tpu_custom_call.1} parent=1 // pred_check
      _
    $region43: #{tpu_custom_call.1} parent=1 // pred_check_branch
      %224 = sbr.rel (0) target = $region45
    $region44: #{tpu_custom_call.1} parent=1 // pred_region
      %s226 = ssub.s32 16, 16
      %227 = vsyncadd [#allocation5], %s226
      %s229 = sshll.u32 [#allocation9], 4
      %s230 = int_to_ptr.vmem [resolvable:$true] %s229
      %232 = dma.vmem_to_hbm [thread:$0]  %s230, 16, %s7, [#allocation5]
    $region45: #{tpu_custom_call.1} parent=1 // pred_fallthru
      _
    // Predicated region
    $region46: #{tpu_custom_call.1} parent=1 // pred_check
      _
    $region47: #{tpu_custom_call.1} parent=1 // pred_check_branch
      %234 = sbr.rel (0) target = $region49
    $region48: #{tpu_custom_call.1} parent=1 // pred_region
      %235 = dma.done [#allocation5], 16
    $region49: #{tpu_custom_call.1} parent=1 // pred_fallthru
      _
    %236 = vsyncpa [#allocation4], 1
    %237 = vsyncpa [#allocation7], 1
    %238 = vsyncpa [#allocation5], 1

</llo_original>
